<compile_context>
chip_gen: v7x
topology: tpu7x:2x2x1
jax: 0.10.0
libtpu: 0.0.40
codegen_flags: <defaults>
</compile_context>

<pallas_src>
import functools

import jax
import jax.numpy as jnp
from jax import lax
from jax.experimental import pallas as pl
from jax.experimental.pallas import tpu as pltpu


def _edge_kernel(x_ref, w1r_ref, b1r_ref, w2r_ref, b2_ref, out_ref, xt_ref,
                 *, H, W, C1):
    """Fused conv1(1->C1,3x3,p1) -> ReLU -> conv2(C1->1,3x3,p1), one image.

    x_ref:   (1, 1, H, W)   VMEM  raw input block (no wrapper-side padding)
    w1r_ref: (9, LV1)       VMEM  conv1 weights, per-tap lane-packed rows
    b1r_ref: (1, LV1)       VMEM  conv1 bias, lane-packed row
    w2r_ref: (9, LV2)       VMEM  conv2 weights, per-tap lane-packed rows
    b2_ref:  (1,)           SMEM  conv2 bias scalar
    out_ref: (1, 1, H, W)   VMEM
    xt_ref:  (H+4, C1*(W+4)) VMEM scratch: padded, channel-replicated input
    """
    Lseg = W + 4                 # per-channel lane segment (input padded by 2)
    L1 = C1 * Lseg               # packed input slab lane width
    LV1 = L1 - 2                 # conv1 tap-view / packed intermediate width
    LV2 = L1 - 4                 # conv2 tap-view / packed accumulator width
    Hp = H + 2                   # padded intermediate height

    # --- zero-padded, lane-replicated input slab in VMEM scratch -------------
    xt_ref[...] = jnp.zeros_like(xt_ref)           # tiny (few vregs), per step
    x = x_ref[0, 0]                                 # (H, W)
    for c in range(C1):
        xt_ref[2:2 + H, c * Lseg + 2:c * Lseg + 2 + W] = x
    xt = xt_ref[...]                                # (H+4, L1)

    # --- conv1: 9 packed tap FMAs (VPU; K=9 is far too small for the MXU) ----
    acc1 = jnp.broadcast_to(b1r_ref[...], (Hp, LV1))
    for kh in range(3):
        for kw in range(3):
            t = kh * 3 + kw
            acc1 = acc1 + xt[kh:kh + Hp, kw:kw + LV1] * w1r_ref[t:t + 1, :]

    # --- ReLU + zero the 1-pixel border ring of every channel segment --------
    rows = lax.broadcasted_iota(jnp.int32, (Hp, LV1), 0)
    lane = lax.broadcasted_iota(jnp.int32, (Hp, LV1), 1)
    col_ok = (lane >= 1) & (lane <= W)
    for c in range(1, C1):
        col_ok |= (lane >= c * Lseg + 1) & (lane <= c * Lseg + W)
    interior = (rows >= 1) & (rows <= H) & col_ok
    hpad = jnp.where(interior, jnp.maximum(acc1, 0.0), 0.0)    # (Hp, LV1)

    # --- conv2: 9 packed tap FMAs on the packed intermediate -----------------
    acc2 = jnp.zeros((H, LV2), jnp.float32)
    for kh in range(3):
        for kw in range(3):
            t = kh * 3 + kw
            acc2 = acc2 + hpad[kh:kh + H, kw:kw + LV2] * w2r_ref[t:t + 1, :]

    # --- reduce the C1 lane segments + bias -----------------------------------
    out = acc2[:, 0:W]
    for c in range(1, C1):
        out = out + acc2[:, c * Lseg:c * Lseg + W]
    # NOTE: W=16 < 128 lanes -> masked store; negligible at this size.
    out_ref[0, 0] = out + b2_ref[0]


@jax.jit
def edge_detector_forward(x, w1, b1, w2, b2):
    """Matches EdgeDetector.forward. x: (N,1,H,W); w1:(5,1,3,3); w2:(1,5,3,3)."""
    N, Cin, H, W = x.shape
    assert Cin == 1 and w2.shape[0] == 1
    C1 = w1.shape[0]
    Lseg = W + 4
    L1 = C1 * Lseg
    LV1 = L1 - 2
    LV2 = L1 - 4

    # Parameter-sized packed per-tap weight / bias rows (channel c occupies
    # lanes [c*Lseg, (c+1)*Lseg)).  Tiny; would be precomputed once in practice.
    w1_rows = jnp.repeat(w1.reshape(C1, 9).T, Lseg, axis=1)[:, :LV1]   # (9, LV1)
    b1_row = jnp.repeat(b1, Lseg)[None, :LV1]                           # (1, LV1)
    w2_rows = jnp.repeat(w2.reshape(C1, 9).T, Lseg, axis=1)[:, :LV2]   # (9, LV2)
    b2_vec = b2.reshape(1)

    kernel = functools.partial(_edge_kernel, H=H, W=W, C1=C1)
    flops = 2 * 2 * 9 * C1 * H * W * N           # two 3x3 convs, MAC = 2 flops
    bytes_accessed = 4 * (2 * N * H * W + 9 * (LV1 + LV2) + LV1 + 1)

    return pl.pallas_call(
        kernel,
        out_shape=jax.ShapeDtypeStruct((N, 1, H, W), jnp.float32),
        grid_spec=pltpu.PrefetchScalarGridSpec(
            num_scalar_prefetch=0,
            grid=(N,),
            in_specs=[
                pl.BlockSpec((1, 1, H, W), lambda n: (n, 0, 0, 0)),
                pl.BlockSpec((9, LV1), lambda n: (0, 0)),
                pl.BlockSpec((1, LV1), lambda n: (0, 0)),
                pl.BlockSpec((9, LV2), lambda n: (0, 0)),
                pl.BlockSpec(memory_space=pltpu.MemorySpace.SMEM),
            ],
            out_specs=pl.BlockSpec((1, 1, H, W), lambda n: (n, 0, 0, 0)),
            scratch_shapes=[pltpu.VMEM((H + 4, L1), jnp.float32)],
        ),
        compiler_params=pltpu.CompilerParams(dimension_semantics=("parallel",)),
        cost_estimate=pl.CostEstimate(flops=flops, transcendentals=0,
                                      bytes_accessed=bytes_accessed),
    )(x, w1_rows, b1_row, w2_rows, b2_vec)


def reference_forward(x, w1, b1, w2, b2):
    """Pure-JAX reference (mirrors torch.nn.Conv2d NCHW semantics)."""
    def conv(z, w, b):
        y = lax.conv_general_dilated(
            z, w, window_strides=(1, 1), padding=((1, 1), (1, 1)),
            dimension_numbers=("NCHW", "OIHW", "NCHW"),
        )
        return y + b[None, :, None, None]

    h = jnp.maximum(conv(x, w1, b1), 0.0)
    return conv(h, w2, b2)


if __name__ == "__main__":
    key = jax.random.PRNGKey(0)
    kx, kw1, kb1, kw2, kb2 = jax.random.split(key, 5)

    # Input: batch=2, inChannels=1, spatial=16x16 (NCHW, as PyTorch expects).
    x = jax.random.normal(kx, (2, 1, 16, 16), dtype=jnp.float32)

    # Deterministic synthetic parameters (Conv2d default has bias=True).
    w1 = jax.random.normal(kw1, (5, 1, 3, 3), dtype=jnp.float32) * 0.3
    b1 = jax.random.normal(kb1, (5,), dtype=jnp.float32) * 0.1
    w2 = jax.random.normal(kw2, (1, 5, 3, 3), dtype=jnp.float32) * 0.3
    b2 = jax.random.normal(kb2, (1,), dtype=jnp.float32) * 0.1

    out = edge_detector_forward(x, w1, b1, w2, b2)
    out = jax.block_until_ready(out)

    ref = reference_forward(x, w1, b1, w2, b2)
    assert out.shape == (2, 1, 16, 16), out.shape
    assert jnp.allclose(out, ref, atol=1e-4, rtol=1e-4), "mismatch vs reference conv"

    print("KERNEL_OK")
</pallas_src>

<mosaic_0001>
module attributes {stable_mosaic.version = 11 : i64} {
  func.func @_edge_kernel(%arg0: i32, %arg1: memref<1x1x16x16xf32, #tpu.memory_space<vmem>>, %arg2: memref<9x98xf32, #tpu.memory_space<vmem>>, %arg3: memref<1x98xf32, #tpu.memory_space<vmem>>, %arg4: memref<9x96xf32, #tpu.memory_space<vmem>>, %arg5: memref<1xf32, #tpu.memory_space<smem>>, %arg6: memref<1x1x16x16xf32, #tpu.memory_space<vmem>>, %arg7: memref<20x100xf32, #tpu.memory_space<vmem>>) attributes {dimension_semantics = [#tpu.dimension_semantics<parallel>], iteration_bounds = array<i64: 2>, scalar_prefetch = 0 : i64, scratch_operands = 1 : i64, tpu.core_type = #tpu.core_type<tc>, window_params = [{transform_indices = @transform_0, window_bounds = array<i64: 1, 1, 16, 16>}, {pipeline_mode = #tpu.pipeline_mode<synchronous>, transform_indices = @transform_1, window_bounds = array<i64: 9, 98>}, {pipeline_mode = #tpu.pipeline_mode<synchronous>, transform_indices = @transform_2, window_bounds = array<i64: 1, 98>}, {pipeline_mode = #tpu.pipeline_mode<synchronous>, transform_indices = @transform_3, window_bounds = array<i64: 9, 96>}, {transform_indices = @transform_4, window_bounds = array<i64: 1>}, {transform_indices = @transform_5, window_bounds = array<i64: 1, 1, 16, 16>}]} {
    %cst = arith.constant 0.000000e+00 : f32
    %0 = vector.broadcast %cst : f32 to vector<20x100xf32>
    %c0 = arith.constant 0 : index
    %c0_0 = arith.constant 0 : index
    %1 = vector.load %arg7[%c0, %c0_0] : memref<20x100xf32, #tpu.memory_space<vmem>>, vector<20x100xf32>
    tpu.vector_store %arg7[%c0, %c0_0], %0 {strides = array<i32>} : memref<20x100xf32, #tpu.memory_space<vmem>>, vector<20x100xf32>,
    %c0_1 = arith.constant 0 : index
    %c0_2 = arith.constant 0 : index
    %c0_3 = arith.constant 0 : index
    %c0_4 = arith.constant 0 : index
    %2 = vector.load %arg1[%c0_1, %c0_2, %c0_3, %c0_4] : memref<1x1x16x16xf32, #tpu.memory_space<vmem>>, vector<1x1x16x16xf32>
    %3 = vector.shape_cast %2 : vector<1x1x16x16xf32> to vector<16x16xf32>
    %c2 = arith.constant 2 : index
    %c2_5 = arith.constant 2 : index
    %4 = vector.load %arg7[%c2, %c2_5] : memref<20x100xf32, #tpu.memory_space<vmem>>, vector<16x16xf32>
    tpu.vector_store %arg7[%c2, %c2_5], %3 {strides = array<i32>} : memref<20x100xf32, #tpu.memory_space<vmem>>, vector<16x16xf32>,
    %c2_6 = arith.constant 2 : index
    %c22 = arith.constant 22 : index
    %5 = vector.load %arg7[%c2_6, %c22] : memref<20x100xf32, #tpu.memory_space<vmem>>, vector<16x16xf32>
    tpu.vector_store %arg7[%c2_6, %c22], %3 {strides = array<i32>} : memref<20x100xf32, #tpu.memory_space<vmem>>, vector<16x16xf32>,
    %c2_7 = arith.constant 2 : index
    %c42 = arith.constant 42 : index
    %6 = vector.load %arg7[%c2_7, %c42] : memref<20x100xf32, #tpu.memory_space<vmem>>, vector<16x16xf32>
    tpu.vector_store %arg7[%c2_7, %c42], %3 {strides = array<i32>} : memref<20x100xf32, #tpu.memory_space<vmem>>, vector<16x16xf32>,
    %c2_8 = arith.constant 2 : index
    %c62 = arith.constant 62 : index
    %7 = vector.load %arg7[%c2_8, %c62] : memref<20x100xf32, #tpu.memory_space<vmem>>, vector<16x16xf32>
    tpu.vector_store %arg7[%c2_8, %c62], %3 {strides = array<i32>} : memref<20x100xf32, #tpu.memory_space<vmem>>, vector<16x16xf32>,
    %c2_9 = arith.constant 2 : index
    %c82 = arith.constant 82 : index
    %8 = vector.load %arg7[%c2_9, %c82] : memref<20x100xf32, #tpu.memory_space<vmem>>, vector<16x16xf32>
    tpu.vector_store %arg7[%c2_9, %c82], %3 {strides = array<i32>} : memref<20x100xf32, #tpu.memory_space<vmem>>, vector<16x16xf32>,
    %c0_10 = arith.constant 0 : index
    %c0_11 = arith.constant 0 : index
    %9 = vector.load %arg7[%c0_10, %c0_11] : memref<20x100xf32, #tpu.memory_space<vmem>>, vector<20x100xf32>
    %c0_12 = arith.constant 0 : index
    %c0_13 = arith.constant 0 : index
    %10 = vector.load %arg3[%c0_12, %c0_13] : memref<1x98xf32, #tpu.memory_space<vmem>>, vector<1x98xf32>
    %11 = vector.shape_cast %10 : vector<1x98xf32> to vector<1x98xf32>
    %12 = vector.broadcast %11 : vector<1x98xf32> to vector<18x98xf32>
    %13 = vector.extract_strided_slice %9 {offsets = [0, 0], sizes = [18, 98], strides = [1, 1]} : vector<20x100xf32> to vector<18x98xf32>
    %c0_14 = arith.constant 0 : index
    %c0_15 = arith.constant 0 : index
    %14 = vector.load %arg2[%c0_14, %c0_15] : memref<9x98xf32, #tpu.memory_space<vmem>>, vector<1x98xf32>
    %15 = vector.broadcast %14 : vector<1x98xf32> to vector<18x98xf32>
    %16 = arith.mulf %13, %15 : vector<18x98xf32>
    %17 = arith.addf %12, %16 : vector<18x98xf32>
    %18 = vector.extract_strided_slice %9 {offsets = [0, 1], sizes = [18, 98], strides = [1, 1]} : vector<20x100xf32> to vector<18x98xf32>
    %c1 = arith.constant 1 : index
    %c0_16 = arith.constant 0 : index
    %19 = vector.load %arg2[%c1, %c0_16] : memref<9x98xf32, #tpu.memory_space<vmem>>, vector<1x98xf32>
    %20 = vector.broadcast %19 : vector<1x98xf32> to vector<18x98xf32>
    %21 = arith.mulf %18, %20 : vector<18x98xf32>
    %22 = arith.addf %17, %21 : vector<18x98xf32>
    %23 = vector.extract_strided_slice %9 {offsets = [0, 2], sizes = [18, 98], strides = [1, 1]} : vector<20x100xf32> to vector<18x98xf32>
    %c2_17 = arith.constant 2 : index
    %c0_18 = arith.constant 0 : index
    %24 = vector.load %arg2[%c2_17, %c0_18] : memref<9x98xf32, #tpu.memory_space<vmem>>, vector<1x98xf32>
    %25 = vector.broadcast %24 : vector<1x98xf32> to vector<18x98xf32>
    %26 = arith.mulf %23, %25 : vector<18x98xf32>
    %27 = arith.addf %22, %26 : vector<18x98xf32>
    %28 = vector.extract_strided_slice %9 {offsets = [1, 0], sizes = [18, 98], strides = [1, 1]} : vector<20x100xf32> to vector<18x98xf32>
    %c3 = arith.constant 3 : index
    %c0_19 = arith.constant 0 : index
    %29 = vector.load %arg2[%c3, %c0_19] : memref<9x98xf32, #tpu.memory_space<vmem>>, vector<1x98xf32>
    %30 = vector.broadcast %29 : vector<1x98xf32> to vector<18x98xf32>
    %31 = arith.mulf %28, %30 : vector<18x98xf32>
    %32 = arith.addf %27, %31 : vector<18x98xf32>
    %33 = vector.extract_strided_slice %9 {offsets = [1, 1], sizes = [18, 98], strides = [1, 1]} : vector<20x100xf32> to vector<18x98xf32>
    %c4 = arith.constant 4 : index
    %c0_20 = arith.constant 0 : index
    %34 = vector.load %arg2[%c4, %c0_20] : memref<9x98xf32, #tpu.memory_space<vmem>>, vector<1x98xf32>
    %35 = vector.broadcast %34 : vector<1x98xf32> to vector<18x98xf32>
    %36 = arith.mulf %33, %35 : vector<18x98xf32>
    %37 = arith.addf %32, %36 : vector<18x98xf32>
    %38 = vector.extract_strided_slice %9 {offsets = [1, 2], sizes = [18, 98], strides = [1, 1]} : vector<20x100xf32> to vector<18x98xf32>
    %c5 = arith.constant 5 : index
    %c0_21 = arith.constant 0 : index
    %39 = vector.load %arg2[%c5, %c0_21] : memref<9x98xf32, #tpu.memory_space<vmem>>, vector<1x98xf32>
    %40 = vector.broadcast %39 : vector<1x98xf32> to vector<18x98xf32>
    %41 = arith.mulf %38, %40 : vector<18x98xf32>
    %42 = arith.addf %37, %41 : vector<18x98xf32>
    %43 = vector.extract_strided_slice %9 {offsets = [2, 0], sizes = [18, 98], strides = [1, 1]} : vector<20x100xf32> to vector<18x98xf32>
    %c6 = arith.constant 6 : index
    %c0_22 = arith.constant 0 : index
    %44 = vector.load %arg2[%c6, %c0_22] : memref<9x98xf32, #tpu.memory_space<vmem>>, vector<1x98xf32>
    %45 = vector.broadcast %44 : vector<1x98xf32> to vector<18x98xf32>
    %46 = arith.mulf %43, %45 : vector<18x98xf32>
    %47 = arith.addf %42, %46 : vector<18x98xf32>
    %48 = vector.extract_strided_slice %9 {offsets = [2, 1], sizes = [18, 98], strides = [1, 1]} : vector<20x100xf32> to vector<18x98xf32>
    %c7 = arith.constant 7 : index
    %c0_23 = arith.constant 0 : index
    %49 = vector.load %arg2[%c7, %c0_23] : memref<9x98xf32, #tpu.memory_space<vmem>>, vector<1x98xf32>
    %50 = vector.broadcast %49 : vector<1x98xf32> to vector<18x98xf32>
    %51 = arith.mulf %48, %50 : vector<18x98xf32>
    %52 = arith.addf %47, %51 : vector<18x98xf32>
    %53 = vector.extract_strided_slice %9 {offsets = [2, 2], sizes = [18, 98], strides = [1, 1]} : vector<20x100xf32> to vector<18x98xf32>
    %c8 = arith.constant 8 : index
    %c0_24 = arith.constant 0 : index
    %54 = vector.load %arg2[%c8, %c0_24] : memref<9x98xf32, #tpu.memory_space<vmem>>, vector<1x98xf32>
    %55 = vector.broadcast %54 : vector<1x98xf32> to vector<18x98xf32>
    %56 = arith.mulf %53, %55 : vector<18x98xf32>
    %57 = arith.addf %52, %56 : vector<18x98xf32>
    %58 = tpu.iota {dimensions = array<i32: 0>} : vector<18x98xi32>
    %59 = tpu.iota {dimensions = array<i32: 1>} : vector<18x98xi32>
    %c1_i32 = arith.constant 1 : i32
    %60 = vector.broadcast %c1_i32 : i32 to vector<18x98xi32>
    %61 = arith.cmpi sge, %59, %60 : vector<18x98xi32>
    %c16_i32 = arith.constant 16 : i32
    %62 = vector.broadcast %c16_i32 : i32 to vector<18x98xi32>
    %63 = arith.cmpi sle, %59, %62 : vector<18x98xi32>
    %64 = arith.andi %61, %63 : vector<18x98xi1>
    %c21_i32 = arith.constant 21 : i32
    %65 = vector.broadcast %c21_i32 : i32 to vector<18x98xi32>
    %66 = arith.cmpi sge, %59, %65 : vector<18x98xi32>
    %c36_i32 = arith.constant 36 : i32
    %67 = vector.broadcast %c36_i32 : i32 to vector<18x98xi32>
    %68 = arith.cmpi sle, %59, %67 : vector<18x98xi32>
    %69 = arith.andi %66, %68 : vector<18x98xi1>
    %70 = arith.ori %64, %69 : vector<18x98xi1>
    %c41_i32 = arith.constant 41 : i32
    %71 = vector.broadcast %c41_i32 : i32 to vector<18x98xi32>
    %72 = arith.cmpi sge, %59, %71 : vector<18x98xi32>
    %c56_i32 = arith.constant 56 : i32
    %73 = vector.broadcast %c56_i32 : i32 to vector<18x98xi32>
    %74 = arith.cmpi sle, %59, %73 : vector<18x98xi32>
    %75 = arith.andi %72, %74 : vector<18x98xi1>
    %76 = arith.ori %70, %75 : vector<18x98xi1>
    %c61_i32 = arith.constant 61 : i32
    %77 = vector.broadcast %c61_i32 : i32 to vector<18x98xi32>
    %78 = arith.cmpi sge, %59, %77 : vector<18x98xi32>
    %c76_i32 = arith.constant 76 : i32
    %79 = vector.broadcast %c76_i32 : i32 to vector<18x98xi32>
    %80 = arith.cmpi sle, %59, %79 : vector<18x98xi32>
    %81 = arith.andi %78, %80 : vector<18x98xi1>
    %82 = arith.ori %76, %81 : vector<18x98xi1>
    %c81_i32 = arith.constant 81 : i32
    %83 = vector.broadcast %c81_i32 : i32 to vector<18x98xi32>
    %84 = arith.cmpi sge, %59, %83 : vector<18x98xi32>
    %c96_i32 = arith.constant 96 : i32
    %85 = vector.broadcast %c96_i32 : i32 to vector<18x98xi32>
    %86 = arith.cmpi sle, %59, %85 : vector<18x98xi32>
    %87 = arith.andi %84, %86 : vector<18x98xi1>
    %88 = arith.ori %82, %87 : vector<18x98xi1>
    %c1_i32_25 = arith.constant 1 : i32
    %89 = vector.broadcast %c1_i32_25 : i32 to vector<18x98xi32>
    %90 = arith.cmpi sge, %58, %89 : vector<18x98xi32>
    %c16_i32_26 = arith.constant 16 : i32
    %91 = vector.broadcast %c16_i32_26 : i32 to vector<18x98xi32>
    %92 = arith.cmpi sle, %58, %91 : vector<18x98xi32>
    %93 = arith.andi %90, %92 : vector<18x98xi1>
    %94 = arith.andi %93, %88 : vector<18x98xi1>
    %cst_27 = arith.constant 0.000000e+00 : f32
    %95 = vector.broadcast %cst_27 : f32 to vector<18x98xf32>
    %96 = arith.maximumf %57, %95 : vector<18x98xf32>
    %cst_28 = arith.constant 0.000000e+00 : f32
    %97 = vector.broadcast %cst_28 : f32 to vector<18x98xf32>
    %98 = arith.select %94, %96, %97 : vector<18x98xi1>, vector<18x98xf32>
    %cst_29 = arith.constant 0.000000e+00 : f32
    %99 = vector.broadcast %cst_29 : f32 to vector<16x96xf32>
    %100 = vector.extract_strided_slice %98 {offsets = [0, 0], sizes = [16, 96], strides = [1, 1]} : vector<18x98xf32> to vector<16x96xf32>
    %c0_30 = arith.constant 0 : index
    %c0_31 = arith.constant 0 : index
    %101 = vector.load %arg4[%c0_30, %c0_31] : memref<9x96xf32, #tpu.memory_space<vmem>>, vector<1x96xf32>
    %102 = vector.broadcast %101 : vector<1x96xf32> to vector<16x96xf32>
    %103 = arith.mulf %100, %102 : vector<16x96xf32>
    %104 = arith.addf %99, %103 : vector<16x96xf32>
    %105 = vector.extract_strided_slice %98 {offsets = [0, 1], sizes = [16, 96], strides = [1, 1]} : vector<18x98xf32> to vector<16x96xf32>
    %c1_32 = arith.constant 1 : index
    %c0_33 = arith.constant 0 : index
    %106 = vector.load %arg4[%c1_32, %c0_33] : memref<9x96xf32, #tpu.memory_space<vmem>>, vector<1x96xf32>
    %107 = vector.broadcast %106 : vector<1x96xf32> to vector<16x96xf32>
    %108 = arith.mulf %105, %107 : vector<16x96xf32>
    %109 = arith.addf %104, %108 : vector<16x96xf32>
    %110 = vector.extract_strided_slice %98 {offsets = [0, 2], sizes = [16, 96], strides = [1, 1]} : vector<18x98xf32> to vector<16x96xf32>
    %c2_34 = arith.constant 2 : index
    %c0_35 = arith.constant 0 : index
    %111 = vector.load %arg4[%c2_34, %c0_35] : memref<9x96xf32, #tpu.memory_space<vmem>>, vector<1x96xf32>
    %112 = vector.broadcast %111 : vector<1x96xf32> to vector<16x96xf32>
    %113 = arith.mulf %110, %112 : vector<16x96xf32>
    %114 = arith.addf %109, %113 : vector<16x96xf32>
    %115 = vector.extract_strided_slice %98 {offsets = [1, 0], sizes = [16, 96], strides = [1, 1]} : vector<18x98xf32> to vector<16x96xf32>
    %c3_36 = arith.constant 3 : index
    %c0_37 = arith.constant 0 : index
    %116 = vector.load %arg4[%c3_36, %c0_37] : memref<9x96xf32, #tpu.memory_space<vmem>>, vector<1x96xf32>
    %117 = vector.broadcast %116 : vector<1x96xf32> to vector<16x96xf32>
    %118 = arith.mulf %115, %117 : vector<16x96xf32>
    %119 = arith.addf %114, %118 : vector<16x96xf32>
    %120 = vector.extract_strided_slice %98 {offsets = [1, 1], sizes = [16, 96], strides = [1, 1]} : vector<18x98xf32> to vector<16x96xf32>
    %c4_38 = arith.constant 4 : index
    %c0_39 = arith.constant 0 : index
    %121 = vector.load %arg4[%c4_38, %c0_39] : memref<9x96xf32, #tpu.memory_space<vmem>>, vector<1x96xf32>
    %122 = vector.broadcast %121 : vector<1x96xf32> to vector<16x96xf32>
    %123 = arith.mulf %120, %122 : vector<16x96xf32>
    %124 = arith.addf %119, %123 : vector<16x96xf32>
    %125 = vector.extract_strided_slice %98 {offsets = [1, 2], sizes = [16, 96], strides = [1, 1]} : vector<18x98xf32> to vector<16x96xf32>
    %c5_40 = arith.constant 5 : index
    %c0_41 = arith.constant 0 : index
    %126 = vector.load %arg4[%c5_40, %c0_41] : memref<9x96xf32, #tpu.memory_space<vmem>>, vector<1x96xf32>
    %127 = vector.broadcast %126 : vector<1x96xf32> to vector<16x96xf32>
    %128 = arith.mulf %125, %127 : vector<16x96xf32>
    %129 = arith.addf %124, %128 : vector<16x96xf32>
    %130 = vector.extract_strided_slice %98 {offsets = [2, 0], sizes = [16, 96], strides = [1, 1]} : vector<18x98xf32> to vector<16x96xf32>
    %c6_42 = arith.constant 6 : index
    %c0_43 = arith.constant 0 : index
    %131 = vector.load %arg4[%c6_42, %c0_43] : memref<9x96xf32, #tpu.memory_space<vmem>>, vector<1x96xf32>
    %132 = vector.broadcast %131 : vector<1x96xf32> to vector<16x96xf32>
    %133 = arith.mulf %130, %132 : vector<16x96xf32>
    %134 = arith.addf %129, %133 : vector<16x96xf32>
    %135 = vector.extract_strided_slice %98 {offsets = [2, 1], sizes = [16, 96], strides = [1, 1]} : vector<18x98xf32> to vector<16x96xf32>
    %c7_44 = arith.constant 7 : index
    %c0_45 = arith.constant 0 : index
    %136 = vector.load %arg4[%c7_44, %c0_45] : memref<9x96xf32, #tpu.memory_space<vmem>>, vector<1x96xf32>
    %137 = vector.broadcast %136 : vector<1x96xf32> to vector<16x96xf32>
    %138 = arith.mulf %135, %137 : vector<16x96xf32>
    %139 = arith.addf %134, %138 : vector<16x96xf32>
    %140 = vector.extract_strided_slice %98 {offsets = [2, 2], sizes = [16, 96], strides = [1, 1]} : vector<18x98xf32> to vector<16x96xf32>
    %c8_46 = arith.constant 8 : index
    %c0_47 = arith.constant 0 : index
    %141 = vector.load %arg4[%c8_46, %c0_47] : memref<9x96xf32, #tpu.memory_space<vmem>>, vector<1x96xf32>
    %142 = vector.broadcast %141 : vector<1x96xf32> to vector<16x96xf32>
    %143 = arith.mulf %140, %142 : vector<16x96xf32>
    %144 = arith.addf %139, %143 : vector<16x96xf32>
    %145 = vector.extract_strided_slice %144 {offsets = [0, 0], sizes = [16, 16], strides = [1, 1]} : vector<16x96xf32> to vector<16x16xf32>
    %146 = vector.extract_strided_slice %144 {offsets = [0, 20], sizes = [16, 16], strides = [1, 1]} : vector<16x96xf32> to vector<16x16xf32>
    %147 = arith.addf %145, %146 : vector<16x16xf32>
    %148 = vector.extract_strided_slice %144 {offsets = [0, 40], sizes = [16, 16], strides = [1, 1]} : vector<16x96xf32> to vector<16x16xf32>
    %149 = arith.addf %147, %148 : vector<16x16xf32>
    %150 = vector.extract_strided_slice %144 {offsets = [0, 60], sizes = [16, 16], strides = [1, 1]} : vector<16x96xf32> to vector<16x16xf32>
    %151 = arith.addf %149, %150 : vector<16x16xf32>
    %152 = vector.extract_strided_slice %144 {offsets = [0, 80], sizes = [16, 16], strides = [1, 1]} : vector<16x96xf32> to vector<16x16xf32>
    %153 = arith.addf %151, %152 : vector<16x16xf32>
    %c0_48 = arith.constant 0 : index
    %154 = memref.load %arg5[%c0_48] : memref<1xf32, #tpu.memory_space<smem>>
    %155 = vector.broadcast %154 : f32 to vector<16x16xf32>
    %156 = arith.addf %153, %155 : vector<16x16xf32>
    %c0_49 = arith.constant 0 : index
    %c0_50 = arith.constant 0 : index
    %c0_51 = arith.constant 0 : index
    %c0_52 = arith.constant 0 : index
    %157 = vector.load %arg6[%c0_49, %c0_50, %c0_51, %c0_52] : memref<1x1x16x16xf32, #tpu.memory_space<vmem>>, vector<1x1x16x16xf32>
    %158 = vector.shape_cast %157 : vector<1x1x16x16xf32> to vector<16x16xf32>
    %159 = vector.shape_cast %156 : vector<16x16xf32> to vector<1x1x16x16xf32>
    tpu.vector_store %arg6[%c0_49, %c0_50, %c0_51, %c0_52], %159 {strides = array<i32>} : memref<1x1x16x16xf32, #tpu.memory_space<vmem>>, vector<1x1x16x16xf32>,
    return
  }
  func.func @transform_0(%arg0: i32) -> (i32, i32, i32, i32) {
    %c0_i32 = arith.constant 0 : i32
    %c0_i32_0 = arith.constant 0 : i32
    %c0_i32_1 = arith.constant 0 : i32
    %c0_i32_2 = arith.constant 0 : i32
    return %arg0, %c0_i32, %c0_i32_0, %c0_i32_1 : i32, i32, i32, i32
  }
  func.func @transform_1(%arg0: i32) -> (i32, i32) {
    %c0_i32 = arith.constant 0 : i32
    %c0_i32_0 = arith.constant 0 : i32
    %c0_i32_1 = arith.constant 0 : i32
    return %c0_i32, %c0_i32_0 : i32, i32
  }
  func.func @transform_2(%arg0: i32) -> (i32, i32) {
    %c0_i32 = arith.constant 0 : i32
    %c0_i32_0 = arith.constant 0 : i32
    %c0_i32_1 = arith.constant 0 : i32
    return %c0_i32, %c0_i32_0 : i32, i32
  }
  func.func @transform_3(%arg0: i32) -> (i32, i32) {
    %c0_i32 = arith.constant 0 : i32
    %c0_i32_0 = arith.constant 0 : i32
    %c0_i32_1 = arith.constant 0 : i32
    return %c0_i32, %c0_i32_0 : i32, i32
  }
  func.func @transform_4(%arg0: i32) -> i32 {
    %c0_i32 = arith.constant 0 : i32
    %c0_i32_0 = arith.constant 0 : i32
    return %c0_i32 : i32
  }
  func.func @transform_5(%arg0: i32) -> (i32, i32, i32, i32) {
    %c0_i32 = arith.constant 0 : i32
    %c0_i32_0 = arith.constant 0 : i32
    %c0_i32_1 = arith.constant 0 : i32
    %c0_i32_2 = arith.constant 0 : i32
    return %arg0, %c0_i32, %c0_i32_0, %c0_i32_1 : i32, i32, i32, i32
  }
}

</mosaic_0001>

<llo_original>
// kernel: edge_detector_forward.1
$region0: #{edge_detector_forward.1}
  #allocation0 [shape = 'u32[]', space=smem, size = 0x4, offset = 0x4, fixed_abs, tag = 'smem constant byte address 0x4 - core index']
  #allocation1 [shape = 'u32[144,128]{1,0:T(1,128)}', space=vmem, size = 0x12000, scoped, tag = 'internal scratch']
  #allocation2 [shape = 'f32[20,100]{1,0:T(8,128)}', space=vmem, size = 0x3000, scoped, tag = 'scratch operand']
  #allocation3 [shape = 'f32[1]{0:T(128)S(6)}', space=smem, size = 0x200, scoped, tag = 'scoped memory for edge_detector_forward.1']
  %s0 = inlined_call_operand.vmem [shape: f32[2,1,16,16], index: 0, kind: input, shape index: {}]
  %s1 = inlined_call_operand.vmem [shape: f32[9,98], index: 1, kind: input, shape index: {}]
  %s2 = inlined_call_operand.vmem [shape: f32[1,98], index: 2, kind: input, shape index: {}]
  %s3 = inlined_call_operand.vmem [shape: f32[9,96], index: 3, kind: input, shape index: {}]
  %s4 = inlined_call_operand.<no memory space> [shape: f32[1], index: 4, kind: input, shape index: {}]
  %s5 = inlined_call_operand.hbm [shape: f32[2,1,16,16], index: 5, kind: output, shape index: {}]
  %s6 = sld [smem:[#allocation0]]
  $region53: #{edge_detector_forward.1} parent=0
    _
  %s8 = ssub.s32 1, %s6
  %s9 = scalar_select 0, %s8, %s6
  %10 = sst [smem:[#allocation3]] %s4
  $region1: #{edge_detector_forward.1} parent=0
    #allocation4 [shape = 'u8[16384]{0}', space=vmem, size = 0x4000, scoped, tag = 'output window, operand 0']
    #allocation5 [shape = 's32[2]{0}', space=sflag, size = 0x8, scoped, tag = 'scoped memory for edge_detector_forward.1']
    %11 = vsyncpa [#allocation5], 0
    %s12 = scalar_lea.sflag [#allocation5], 1
    %13 = vsyncpa %s12, 0
    loop: start=0, step=1, limit=4
    $region2: #{edge_detector_forward.1} parent=1 // loop_pre_header
      _
    $region3: #{edge_detector_forward.1} parent=1 // loop_header
      %s15 = sphi 0, %s19
      %p16 = scmp.ge.s32.totalorder %s15, 4
      %s25 = sphi 0, %s27
      %s28 = sphi 0, %s25
      %s29 = sphi 0, %s28
      %s45 = sphi 0, %s29
      %s49 = sphi 0, %s49
      %s51 = sphi 0, %s49
      %s52 = sphi 0, %s51
      %s66 = sphi 0, %s52
      %s70 = sphi 0, %s70
      %s72 = sphi 0, %s70
      %s73 = sphi 0, %s72
      %s87 = sphi 0, %s73
      %s91 = sphi 0, %s91
      %s93 = sphi 0, %s91
      %s94 = sphi 0, %s93
      %s108 = sphi 0, %s94
      %s112 = sphi 0, %s112
      %s114 = sphi 0, %s112
      %s115 = sphi 0, %s114
      %s129 = sphi 0, %s115
      %s135 = sphi 0, %s137
      %s138 = sphi 0, %s135
      %s139 = sphi 0, %s138
      %s155 = sphi 0, %s139
    $region4: #{edge_detector_forward.1} parent=1 // loop_header_branch
      %18 = sbr.rel (%p16) target = $region8
    $region5: #{edge_detector_forward.1} parent=1 // loop_body
      %s20 = ssub.s32 %s15, 1
      %s21 = ssub.s32 %s15, 2
      %s22 = sadd.s32 %s15, 1
      %s23 = ssub.s32 %s15, %s22
      %p24 = scmp.eq.s32.totalorder %s23, 0
      %s26 = sadd.s32 %s25, 1
      %s27 = scalar_select %p24, %s25, %s26
      %p30 = pneg %p24
      %p31 = scmp.eq.s32.totalorder %s15, 1
      %p32 = por %p30, %p31
      %p33 = scmp.ne.s32.totalorder %s25, %s28
      %p34 = scmp.eq.s32.totalorder %s15, 0
      %p35 = por %p33, %p34
      %p36 = scmp.ne.s32.totalorder %s25, %s28
      %p37 = scmp.eq.s32.totalorder %s20, 1
      %p38 = por %p36, %p37
      %p39 = scmp.ne.s32.totalorder %s28, %s29
      %p40 = scmp.eq.s32.totalorder %s20, 0
      %p41 = por %p39, %p40
      %p42 = scmp.ne.s32.totalorder %s28, %s29
      %p43 = scmp.eq.s32.totalorder %s21, 1
      %p44 = por %p42, %p43
      %p46 = scmp.ne.s32.totalorder %s29, %s45
      %p47 = scmp.eq.s32.totalorder %s21, 0
      %p48 = por %p46, %p47
      %s50 = sadd.s32 %s49, 1
      %p53 = scmp.eq.s32.totalorder %s15, 1
      %p54 = scmp.ne.s32.totalorder %s49, %s51
      %p55 = scmp.eq.s32.totalorder %s15, 0
      %p56 = por %p54, %p55
      %p57 = scmp.ne.s32.totalorder %s49, %s51
      %p58 = scmp.eq.s32.totalorder %s20, 1
      %p59 = por %p57, %p58
      %p60 = scmp.ne.s32.totalorder %s51, %s52
      %p61 = scmp.eq.s32.totalorder %s20, 0
      %p62 = por %p60, %p61
      %p63 = scmp.ne.s32.totalorder %s51, %s52
      %p64 = scmp.eq.s32.totalorder %s21, 1
      %p65 = por %p63, %p64
      %p67 = scmp.ne.s32.totalorder %s52, %s66
      %p68 = scmp.eq.s32.totalorder %s21, 0
      %p69 = por %p67, %p68
      %s71 = sadd.s32 %s70, 1
      %p74 = scmp.eq.s32.totalorder %s15, 1
      %p75 = scmp.ne.s32.totalorder %s70, %s72
      %p76 = scmp.eq.s32.totalorder %s15, 0
      %p77 = por %p75, %p76
      %p78 = scmp.ne.s32.totalorder %s70, %s72
      %p79 = scmp.eq.s32.totalorder %s20, 1
      %p80 = por %p78, %p79
      %p81 = scmp.ne.s32.totalorder %s72, %s73
      %p82 = scmp.eq.s32.totalorder %s20, 0
      %p83 = por %p81, %p82
      %p84 = scmp.ne.s32.totalorder %s72, %s73
      %p85 = scmp.eq.s32.totalorder %s21, 1
      %p86 = por %p84, %p85
      %p88 = scmp.ne.s32.totalorder %s73, %s87
      %p89 = scmp.eq.s32.totalorder %s21, 0
      %p90 = por %p88, %p89
      %s92 = sadd.s32 %s91, 1
      %p95 = scmp.eq.s32.totalorder %s15, 1
      %p96 = scmp.ne.s32.totalorder %s91, %s93
      %p97 = scmp.eq.s32.totalorder %s15, 0
      %p98 = por %p96, %p97
      %p99 = scmp.ne.s32.totalorder %s91, %s93
      %p100 = scmp.eq.s32.totalorder %s20, 1
      %p101 = por %p99, %p100
      %p102 = scmp.ne.s32.totalorder %s93, %s94
      %p103 = scmp.eq.s32.totalorder %s20, 0
      %p104 = por %p102, %p103
      %p105 = scmp.ne.s32.totalorder %s93, %s94
      %p106 = scmp.eq.s32.totalorder %s21, 1
      %p107 = por %p105, %p106
      %p109 = scmp.ne.s32.totalorder %s94, %s108
      %p110 = scmp.eq.s32.totalorder %s21, 0
      %p111 = por %p109, %p110
      %s113 = sadd.s32 %s112, 1
      %p116 = scmp.eq.s32.totalorder %s15, 1
      %p117 = scmp.ne.s32.totalorder %s112, %s114
      %p118 = scmp.eq.s32.totalorder %s15, 0
      %p119 = por %p117, %p118
      %p120 = scmp.ne.s32.totalorder %s112, %s114
      %p121 = scmp.eq.s32.totalorder %s20, 1
      %p122 = por %p120, %p121
      %p123 = scmp.ne.s32.totalorder %s114, %s115
      %p124 = scmp.eq.s32.totalorder %s20, 0
      %p125 = por %p123, %p124
      %p126 = scmp.ne.s32.totalorder %s114, %s115
      %p127 = scmp.eq.s32.totalorder %s21, 1
      %p128 = por %p126, %p127
      %p130 = scmp.ne.s32.totalorder %s115, %s129
      %p131 = scmp.eq.s32.totalorder %s21, 0
      %p132 = por %p130, %p131
      %s133 = ssub.s32 %s15, %s22
      %p134 = scmp.eq.s32.totalorder %s133, 0
      %s136 = sadd.s32 %s135, 1
      %s137 = scalar_select %p134, %s135, %s136
      %p140 = pneg %p134
      %p141 = scmp.eq.s32.totalorder %s15, 1
      %p142 = por %p140, %p141
      %p143 = scmp.ne.s32.totalorder %s135, %s138
      %p144 = scmp.eq.s32.totalorder %s15, 0
      %p145 = por %p143, %p144
      %p146 = scmp.ne.s32.totalorder %s135, %s138
      %p147 = scmp.eq.s32.totalorder %s20, 1
      %p148 = por %p146, %p147
      %p149 = scmp.ne.s32.totalorder %s138, %s139
      %p150 = scmp.eq.s32.totalorder %s20, 0
      %p151 = por %p149, %p150
      %p152 = scmp.ne.s32.totalorder %s138, %s139
      %p153 = scmp.eq.s32.totalorder %s21, 1
      %p154 = por %p152, %p153
      %p156 = scmp.ne.s32.totalorder %s139, %s155
      %p157 = scmp.eq.s32.totalorder %s21, 0
      %p158 = por %p156, %p157
      %p159 = scmp.le.s32.totalorder 1, %s15
      %p160 = scmp.lt.s32.totalorder %s15, 3
      %p161 = pnand %p159, %p160
      %p162 = pneg %p161
      // Predicated region
      $region9: #{edge_detector_forward.1} parent=5 // pred_check
        _
      $region10: #{edge_detector_forward.1} parent=5 // pred_check_branch
        %164 = sbr.rel (%p161) target = $region12
      $region11: #{edge_detector_forward.1} parent=5 // pred_region
        %s165 = ssub.s32 %s15, 1
        // Predicated region
        $region13: #{edge_detector_forward.1} parent=11 // pred_check
          %p166 = pneg %p62
        $region14: #{edge_detector_forward.1} parent=11 // pred_check_branch
          %168 = sbr.rel (%p166) target = $region16
        $region15: #{edge_detector_forward.1} parent=11 // pred_region
          _
        $region16: #{edge_detector_forward.1} parent=11 // pred_fallthru
          _
        // Predicated region
        $region17: #{edge_detector_forward.1} parent=11 // pred_check
          %p169 = pneg %p83
        $region18: #{edge_detector_forward.1} parent=11 // pred_check_branch
          %171 = sbr.rel (%p169) target = $region20
        $region19: #{edge_detector_forward.1} parent=11 // pred_region
          _
        $region20: #{edge_detector_forward.1} parent=11 // pred_fallthru
          _
        // Predicated region
        $region21: #{edge_detector_forward.1} parent=11 // pred_check
          %p172 = pneg %p104
        $region22: #{edge_detector_forward.1} parent=11 // pred_check_branch
          %174 = sbr.rel (%p172) target = $region24
        $region23: #{edge_detector_forward.1} parent=11 // pred_region
          _
        $region24: #{edge_detector_forward.1} parent=11 // pred_fallthru
          _
        // Predicated region
        $region25: #{edge_detector_forward.1} parent=11 // pred_check
          %p175 = pneg %p125
        $region26: #{edge_detector_forward.1} parent=11 // pred_check_branch
          %177 = sbr.rel (%p175) target = $region28
        $region27: #{edge_detector_forward.1} parent=11 // pred_region
          _
        $region28: #{edge_detector_forward.1} parent=11 // pred_fallthru
          _
      $region12: #{edge_detector_forward.1} parent=5 // pred_fallthru
        _
      %p178 = scmp.lt.s32.totalorder %s15, 2
      // Predicated region
      $region29: #{edge_detector_forward.1} parent=5 // pred_check
        %p179 = pneg %p178
      $region30: #{edge_detector_forward.1} parent=5 // pred_check_branch
        %181 = sbr.rel (%p179) target = $region32
      $region31: #{edge_detector_forward.1} parent=5 // pred_region
        // Predicated region
        $region33: #{edge_detector_forward.1} parent=31 // pred_check
          %p182 = pneg %p35
        $region34: #{edge_detector_forward.1} parent=31 // pred_check_branch
          %184 = sbr.rel (%p182) target = $region36
        $region35: #{edge_detector_forward.1} parent=31 // pred_region
          %p185 = scmp.lt.s32.totalorder %s15, 1
          %s186 = scalar_select %p185, %s15, 1
          %s187 = smul.addr %s186, 2
          %s188 = smul.addr %s187, 8
          %s189 = scalar_lea.vmem %s0, %s188
        $region36: #{edge_detector_forward.1} parent=31 // pred_fallthru
          _
      $region32: #{edge_detector_forward.1} parent=5 // pred_fallthru
        _
      %p190 = scmp.le.s32.totalorder 1, %s15
      %p191 = scmp.lt.s32.totalorder %s15, 3
      %p192 = pnand %p190, %p191
      %p193 = pneg %p192
      // Predicated region
      $region37: #{edge_detector_forward.1} parent=5 // pred_check
        _
      $region38: #{edge_detector_forward.1} parent=5 // pred_check_branch
        %195 = sbr.rel (%p192) target = $region40
      $region39: #{edge_detector_forward.1} parent=5 // pred_region
        %s196 = ssub.s32 %s15, 1
        %p197 = scmp.lt.s32.totalorder %s20, 1
        %s198 = scalar_select %p197, %s20, 1
        %s199 = smul.addr %s198, 2
        %s200 = smul.addr %s199, 8
        %s201 = scalar_lea.vmem %s0, %s200
        %p202 = pneg %p41
        %p203 = pneg %p38
        %p204 = pneg %p62
        %p205 = pneg %p59
        %p206 = pneg %p83
        %p207 = pneg %p80
        %p208 = pneg %p104
        %p209 = pneg %p101
        %p210 = pneg %p125
        %p211 = pneg %p122
        %p212 = pneg %p151
        %p213 = pneg %p148
        %s214 = sand.u32 %s138, 1
        %s215 = scalar_lea.sflag [#allocation5], %s214
        %s216 = sand.u32 %s138, 1
        %s217 = smul.addr %s216, 16
        %s218 = scalar_lea.vmem [#allocation4], %s217
        %p219 = scmp.lt.s32.totalorder %s20, 1
        %s220 = scalar_select %p219, %s20, 1
        %s221 = smul.addr %s220, 2
        %s222 = smul.addr %s221, 8
        %s223 = scalar_lea.vmem %s0, %s222
        %vm224 = vcmask 818176
        %225 = vst.msk [vmem:[#allocation2] sm:$0xff] %vm224, 0.0
        %226 = vst.msk [vmem:[#allocation2 + $0x8] sm:$0xff] %vm224, 0.0
        %vm227 = vcmask 814080
        %228 = vst.msk [vmem:[#allocation2 + $0x10] sm:$0xf] %vm227, 0.0
        %v229 = vld [vmem:[%s223] sm:$0xff]
        %v230 = vld [vmem:[%s223 + $0x8] sm:$0xff]
        %233 = vrot.lane.b32.xlu0 %v229, 2
        %v234 = vpop.permute.xlu0 %233
        %235 = vrot.lane.b32.xlu0 %v230, 2
        %v236 = vpop.permute.xlu0 %235
        %vm239 = vcmask 146448
        %240 = vst.msk [vmem:[#allocation2 + $0x2] sm:$0xff] %vm239, %v234
        %241 = vst.msk [vmem:[#allocation2 + $0xa] sm:$0xff] %vm239, %v236
        %242 = vrot.lane.b32.xlu0 %v229, 22
        %v243 = vpop.permute.xlu0 %242
        %244 = vrot.lane.b32.xlu0 %v230, 22
        %v245 = vpop.permute.xlu0 %244
        %vm248 = vcmask 310448
        %249 = vst.msk [vmem:[#allocation2 + $0x2] sm:$0xff] %vm248, %v243
        %250 = vst.msk [vmem:[#allocation2 + $0xa] sm:$0xff] %vm248, %v245
        %251 = vrot.lane.b32.xlu0 %v229, 42
        %v252 = vpop.permute.xlu0 %251
        %253 = vrot.lane.b32.xlu0 %v230, 42
        %v254 = vpop.permute.xlu0 %253
        %vm257 = vcmask 474448
        %258 = vst.msk [vmem:[#allocation2 + $0x2] sm:$0xff] %vm257, %v252
        %259 = vst.msk [vmem:[#allocation2 + $0xa] sm:$0xff] %vm257, %v254
        %260 = vrot.lane.b32.xlu0 %v229, 62
        %v261 = vpop.permute.xlu0 %260
        %262 = vrot.lane.b32.xlu0 %v230, 62
        %v263 = vpop.permute.xlu0 %262
        %vm266 = vcmask 638448
        %267 = vst.msk [vmem:[#allocation2 + $0x2] sm:$0xff] %vm266, %v261
        %268 = vst.msk [vmem:[#allocation2 + $0xa] sm:$0xff] %vm266, %v263
        %269 = vrot.lane.b32.xlu0 %v229, 82
        %v270 = vpop.permute.xlu0 %269
        %271 = vrot.lane.b32.xlu0 %v230, 82
        %v272 = vpop.permute.xlu0 %271
        %vm275 = vcmask 802448
        %276 = vst.msk [vmem:[#allocation2 + $0x2] sm:$0xff] %vm275, %v270
        %277 = vst.msk [vmem:[#allocation2 + $0xa] sm:$0xff] %vm275, %v272
        %v278 = vld [vmem:[#allocation2] sm:$0xff]
        %v279 = vld [vmem:[#allocation2 + $0x8] sm:$0xff]
        %v280 = vld [vmem:[#allocation2 + $0x10] sm:$0xf]
        %v281 = vld [vmem:[%s2] sm:$0x1]
        %v283 = vlaneseq
        %v284 = vshrl.u32 %v283, 7
        %v285 = vsub.s32 0, %v284
        %v286 = vrot.slane %v281, %v285
        %v288 = vld [vmem:[%s1] sm:$0x1]
        %v289 = vlaneseq
        %v290 = vshrl.u32 %v289, 7
        %v291 = vsub.s32 0, %v290
        %v292 = vrot.slane %v288, %v291
        %v293 = vmul.f32 %v278, %v292
        %v294 = vmul.f32 %v279, %v292
        %v295 = vmul.f32 %v280, %v292
        %v296 = vadd.f32 %v286, %v293
        %v297 = vadd.f32 %v286, %v294
        %v298 = vadd.f32 %v286, %v295
        %v299 = vld [vmem:[%s1 + $0x1] sm:$0x1]
        %v300 = vlaneseq
        %v301 = vshrl.u32 %v300, 7
        %v302 = vsub.s32 0, %v301
        %v303 = vrot.slane %v299, %v302
        %305 = vrot.lane.b32.xlu0 %v303, 1
        %v306 = vpop.permute.xlu0 %305
        %v308 = vmul.f32 %v278, %v306
        %v309 = vmul.f32 %v279, %v306
        %v310 = vmul.f32 %v280, %v306
        %314 = vrot.lane.b32.xlu0 %v308, 127
        %v315 = vpop.permute.xlu0 %314
        %316 = vrot.lane.b32.xlu0 %v309, 127
        %v317 = vpop.permute.xlu0 %316
        %318 = vrot.lane.b32.xlu0 %v310, 127
        %v319 = vpop.permute.xlu0 %318
        %v323 = vadd.f32 %v296, %v315
        %v324 = vadd.f32 %v297, %v317
        %v325 = vadd.f32 %v298, %v319
        %v326 = vld [vmem:[%s1 + $0x2] sm:$0x1]
        %v327 = vlaneseq
        %v328 = vshrl.u32 %v327, 7
        %v329 = vsub.s32 0, %v328
        %v330 = vrot.slane %v326, %v329
        %332 = vrot.lane.b32.xlu0 %v330, 2
        %v333 = vpop.permute.xlu0 %332
        %v335 = vmul.f32 %v278, %v333
        %v336 = vmul.f32 %v279, %v333
        %v337 = vmul.f32 %v280, %v333
        %341 = vrot.lane.b32.xlu0 %v335, 126
        %v342 = vpop.permute.xlu0 %341
        %343 = vrot.lane.b32.xlu0 %v336, 126
        %v344 = vpop.permute.xlu0 %343
        %345 = vrot.lane.b32.xlu0 %v337, 126
        %v346 = vpop.permute.xlu0 %345
        %v350 = vadd.f32 %v323, %v342
        %v351 = vadd.f32 %v324, %v344
        %v352 = vadd.f32 %v325, %v346
        %v353 = vld [vmem:[%s1 + $0x3] sm:$0x1]
        %v354 = vlaneseq
        %v355 = vshrl.u32 %v354, 7
        %v356 = vsub.s32 0, %v355
        %v357 = vrot.slane %v353, %v356
        %v358 = vmul.f32 %v278, %v357
        %v359 = vmul.f32 %v279, %v357
        %v360 = vmul.f32 %v280, %v357
        %vm364 = vcmask 1046528
        %v365 = vrot.slane %v358, 1
        %v366 = vrot.slane %v359, 1
        %v367 = vsel %vm364, %v365, %v366
        %v368 = vrot.slane %v360, 1
        %v369 = vsel %vm364, %v366, %v368
        %v373 = vadd.f32 %v350, %v367
        %v374 = vadd.f32 %v351, %v369
        %v375 = vadd.f32 %v352, %v368
        %v376 = vld [vmem:[%s1 + $0x4] sm:$0x1]
        %v377 = vlaneseq
        %v378 = vshrl.u32 %v377, 7
        %v379 = vsub.s32 0, %v378
        %v380 = vrot.slane %v376, %v379
        %382 = vrot.lane.b32.xlu0 %v380, 1
        %v383 = vpop.permute.xlu0 %382
        %v385 = vmul.f32 %v278, %v383
        %v386 = vmul.f32 %v279, %v383
        %v387 = vmul.f32 %v280, %v383
        %v391 = vrot.slane %v385, 1
        %v392 = vrot.slane %v386, 1
        %v393 = vsel %vm364, %v391, %v392
        %v394 = vrot.slane %v387, 1
        %v395 = vsel %vm364, %v392, %v394
        %396 = vrot.lane.b32.xlu0 %v393, 127
        %v397 = vpop.permute.xlu0 %396
        %398 = vrot.lane.b32.xlu0 %v395, 127
        %v399 = vpop.permute.xlu0 %398
        %400 = vrot.lane.b32.xlu0 %v394, 127
        %v401 = vpop.permute.xlu0 %400
        %v405 = vadd.f32 %v373, %v397
        %v406 = vadd.f32 %v374, %v399
        %v407 = vadd.f32 %v375, %v401
        %v408 = vld [vmem:[%s1 + $0x5] sm:$0x1]
        %v409 = vlaneseq
        %v410 = vshrl.u32 %v409, 7
        %v411 = vsub.s32 0, %v410
        %v412 = vrot.slane %v408, %v411
        %414 = vrot.lane.b32.xlu0 %v412, 2
        %v415 = vpop.permute.xlu0 %414
        %v417 = vmul.f32 %v278, %v415
        %v418 = vmul.f32 %v279, %v415
        %v419 = vmul.f32 %v280, %v415
        %v423 = vrot.slane %v417, 1
        %v424 = vrot.slane %v418, 1
        %v425 = vsel %vm364, %v423, %v424
        %v426 = vrot.slane %v419, 1
        %v427 = vsel %vm364, %v424, %v426
        %428 = vrot.lane.b32.xlu0 %v425, 126
        %v429 = vpop.permute.xlu0 %428
        %430 = vrot.lane.b32.xlu0 %v427, 126
        %v431 = vpop.permute.xlu0 %430
        %432 = vrot.lane.b32.xlu0 %v426, 126
        %v433 = vpop.permute.xlu0 %432
        %v437 = vadd.f32 %v405, %v429
        %v438 = vadd.f32 %v406, %v431
        %v439 = vadd.f32 %v407, %v433
        %v440 = vld [vmem:[%s1 + $0x6] sm:$0x1]
        %v441 = vlaneseq
        %v442 = vshrl.u32 %v441, 7
        %v443 = vsub.s32 0, %v442
        %v444 = vrot.slane %v440, %v443
        %v445 = vmul.f32 %v278, %v444
        %v446 = vmul.f32 %v279, %v444
        %v447 = vmul.f32 %v280, %v444
        %vm451 = vcmask 1045504
        %v452 = vrot.slane %v445, 2
        %v453 = vrot.slane %v446, 2
        %v454 = vsel %vm451, %v452, %v453
        %v455 = vrot.slane %v447, 2
        %v456 = vsel %vm451, %v453, %v455
        %v460 = vadd.f32 %v437, %v454
        %v461 = vadd.f32 %v438, %v456
        %v462 = vadd.f32 %v439, %v455
        %v463 = vld [vmem:[%s1 + $0x7] sm:$0x1]
        %v464 = vlaneseq
        %v465 = vshrl.u32 %v464, 7
        %v466 = vsub.s32 0, %v465
        %v467 = vrot.slane %v463, %v466
        %469 = vrot.lane.b32.xlu0 %v467, 1
        %v470 = vpop.permute.xlu0 %469
        %v472 = vmul.f32 %v278, %v470
        %v473 = vmul.f32 %v279, %v470
        %v474 = vmul.f32 %v280, %v470
        %v478 = vrot.slane %v472, 2
        %v479 = vrot.slane %v473, 2
        %v480 = vsel %vm451, %v478, %v479
        %v481 = vrot.slane %v474, 2
        %v482 = vsel %vm451, %v479, %v481
        %483 = vrot.lane.b32.xlu0 %v480, 127
        %v484 = vpop.permute.xlu0 %483
        %485 = vrot.lane.b32.xlu0 %v482, 127
        %v486 = vpop.permute.xlu0 %485
        %487 = vrot.lane.b32.xlu0 %v481, 127
        %v488 = vpop.permute.xlu0 %487
        %v492 = vadd.f32 %v460, %v484
        %v493 = vadd.f32 %v461, %v486
        %v494 = vadd.f32 %v462, %v488
        %v495 = vld [vmem:[%s1 + $0x8] sm:$0x1]
        %v496 = vlaneseq
        %v497 = vshrl.u32 %v496, 7
        %v498 = vsub.s32 0, %v497
        %v499 = vrot.slane %v495, %v498
        %501 = vrot.lane.b32.xlu0 %v499, 2
        %v502 = vpop.permute.xlu0 %501
        %v504 = vmul.f32 %v278, %v502
        %v505 = vmul.f32 %v279, %v502
        %v506 = vmul.f32 %v280, %v502
        %v510 = vrot.slane %v504, 2
        %v511 = vrot.slane %v505, 2
        %v512 = vsel %vm451, %v510, %v511
        %v513 = vrot.slane %v506, 2
        %v514 = vsel %vm451, %v511, %v513
        %515 = vrot.lane.b32.xlu0 %v512, 126
        %v516 = vpop.permute.xlu0 %515
        %517 = vrot.lane.b32.xlu0 %v514, 126
        %v518 = vpop.permute.xlu0 %517
        %519 = vrot.lane.b32.xlu0 %v513, 126
        %v520 = vpop.permute.xlu0 %519
        %v524 = vadd.f32 %v492, %v516
        %v525 = vadd.f32 %v493, %v518
        %v526 = vadd.f32 %v494, %v520
        %v527 = vlaneseq
        %v528 = vshrl.u32 %v527, 7
        %v529 = vadd.s32 %v528, 8
        %v530 = vadd.s32 %v528, 16
        %v531 = vlaneseq
        %v532 = vand.u32 %v531, 127
        %vm533 = vcmp.ge.s32.totalorder %v532, 1
        %vm534 = vcmp.le.s32.totalorder %v532, 16
        %vm535 = vmand %vm533, %vm534
        %vm536 = vcmp.ge.s32.totalorder %v532, 21
        %vm537 = vcmp.le.s32.totalorder %v532, 36
        %vm538 = vmand %vm536, %vm537
        %vm539 = vmor %vm535, %vm538
        %vm540 = vcmp.ge.s32.totalorder %v532, 41
        %vm541 = vcmp.le.s32.totalorder %v532, 56
        %vm542 = vmand %vm540, %vm541
        %vm543 = vmor %vm539, %vm542
        %vm544 = vcmp.ge.s32.totalorder %v532, 61
        %vm545 = vcmp.le.s32.totalorder %v532, 76
        %vm546 = vmand %vm544, %vm545
        %vm547 = vmor %vm543, %vm546
        %vm548 = vcmp.ge.s32.totalorder %v532, 81
        %vm549 = vcmp.le.s32.totalorder %v532, 96
        %vm550 = vmand %vm548, %vm549
        %vm551 = vmor %vm547, %vm550
        %vm552 = vcmp.ge.s32.totalorder %v528, 1
        %vm553 = vcmp.ge.s32.totalorder %v529, 1
        %vm554 = vcmp.ge.s32.totalorder %v530, 1
        %vm555 = vcmp.le.s32.totalorder %v528, 16
        %vm556 = vcmp.le.s32.totalorder %v529, 16
        %vm557 = vcmp.le.s32.totalorder %v530, 16
        %vm558 = vmand %vm552, %vm555
        %vm559 = vmand %vm553, %vm556
        %vm560 = vmand %vm554, %vm557
        %vm561 = vmand %vm558, %vm551
        %vm562 = vmand %vm559, %vm551
        %vm563 = vmand %vm560, %vm551
        %v564 = vmax.f32 %v524, 0.0
        %v565 = vmax.f32 %v525, 0.0
        %v566 = vmax.f32 %v526, 0.0
        %v567 = vsel %vm561, %v564, 0.0
        %v568 = vsel %vm562, %v565, 0.0
        %v569 = vsel %vm563, %v566, 0.0
        %v570 = vld [vmem:[%s3] sm:$0x1]
        %v571 = vlaneseq
        %v572 = vshrl.u32 %v571, 7
        %v573 = vsub.s32 0, %v572
        %v574 = vrot.slane %v570, %v573
        %v575 = vmul.f32 %v567, %v574
        %v576 = vmul.f32 %v568, %v574
        %v577 = vadd.f32 %v575, 0.0
        %v578 = vadd.f32 %v576, 0.0
        %v579 = vld [vmem:[%s3 + $0x1] sm:$0x1]
        %v580 = vlaneseq
        %v581 = vshrl.u32 %v580, 7
        %v582 = vsub.s32 0, %v581
        %v583 = vrot.slane %v579, %v582
        %585 = vrot.lane.b32.xlu0 %v583, 1
        %v586 = vpop.permute.xlu0 %585
        %v588 = vmul.f32 %v567, %v586
        %v589 = vmul.f32 %v568, %v586
        %592 = vrot.lane.b32.xlu0 %v588, 127
        %v593 = vpop.permute.xlu0 %592
        %594 = vrot.lane.b32.xlu0 %v589, 127
        %v595 = vpop.permute.xlu0 %594
        %v598 = vadd.f32 %v577, %v593
        %v599 = vadd.f32 %v578, %v595
        %v600 = vld [vmem:[%s3 + $0x2] sm:$0x1]
        %v601 = vlaneseq
        %v602 = vshrl.u32 %v601, 7
        %v603 = vsub.s32 0, %v602
        %v604 = vrot.slane %v600, %v603
        %606 = vrot.lane.b32.xlu0 %v604, 2
        %v607 = vpop.permute.xlu0 %606
        %v609 = vmul.f32 %v567, %v607
        %v610 = vmul.f32 %v568, %v607
        %613 = vrot.lane.b32.xlu0 %v609, 126
        %v614 = vpop.permute.xlu0 %613
        %615 = vrot.lane.b32.xlu0 %v610, 126
        %v616 = vpop.permute.xlu0 %615
        %v619 = vadd.f32 %v598, %v614
        %v620 = vadd.f32 %v599, %v616
        %v621 = vld [vmem:[%s3 + $0x3] sm:$0x1]
        %v622 = vlaneseq
        %v623 = vshrl.u32 %v622, 7
        %v624 = vsub.s32 0, %v623
        %v625 = vrot.slane %v621, %v624
        %v626 = vmul.f32 %v567, %v625
        %v627 = vmul.f32 %v568, %v625
        %v628 = vmul.f32 %v569, %v625
        %v632 = vrot.slane %v626, 1
        %v633 = vrot.slane %v627, 1
        %v634 = vsel %vm364, %v632, %v633
        %v635 = vrot.slane %v628, 1
        %v636 = vsel %vm364, %v633, %v635
        %v639 = vadd.f32 %v619, %v634
        %v640 = vadd.f32 %v620, %v636
        %v641 = vld [vmem:[%s3 + $0x4] sm:$0x1]
        %v642 = vlaneseq
        %v643 = vshrl.u32 %v642, 7
        %v644 = vsub.s32 0, %v643
        %v645 = vrot.slane %v641, %v644
        %647 = vrot.lane.b32.xlu0 %v645, 1
        %v648 = vpop.permute.xlu0 %647
        %v650 = vmul.f32 %v567, %v648
        %v651 = vmul.f32 %v568, %v648
        %v652 = vmul.f32 %v569, %v648
        %v656 = vrot.slane %v650, 1
        %v657 = vrot.slane %v651, 1
        %v658 = vsel %vm364, %v656, %v657
        %v659 = vrot.slane %v652, 1
        %v660 = vsel %vm364, %v657, %v659
        %661 = vrot.lane.b32.xlu0 %v658, 127
        %v662 = vpop.permute.xlu0 %661
        %663 = vrot.lane.b32.xlu0 %v660, 127
        %v664 = vpop.permute.xlu0 %663
        %v667 = vadd.f32 %v639, %v662
        %v668 = vadd.f32 %v640, %v664
        %v669 = vld [vmem:[%s3 + $0x5] sm:$0x1]
        %v670 = vlaneseq
        %v671 = vshrl.u32 %v670, 7
        %v672 = vsub.s32 0, %v671
        %v673 = vrot.slane %v669, %v672
        %675 = vrot.lane.b32.xlu0 %v673, 2
        %v676 = vpop.permute.xlu0 %675
        %v678 = vmul.f32 %v567, %v676
        %v679 = vmul.f32 %v568, %v676
        %v680 = vmul.f32 %v569, %v676
        %v684 = vrot.slane %v678, 1
        %v685 = vrot.slane %v679, 1
        %v686 = vsel %vm364, %v684, %v685
        %v687 = vrot.slane %v680, 1
        %v688 = vsel %vm364, %v685, %v687
        %689 = vrot.lane.b32.xlu0 %v686, 126
        %v690 = vpop.permute.xlu0 %689
        %691 = vrot.lane.b32.xlu0 %v688, 126
        %v692 = vpop.permute.xlu0 %691
        %v695 = vadd.f32 %v667, %v690
        %v696 = vadd.f32 %v668, %v692
        %v697 = vld [vmem:[%s3 + $0x6] sm:$0x1]
        %v698 = vlaneseq
        %v699 = vshrl.u32 %v698, 7
        %v700 = vsub.s32 0, %v699
        %v701 = vrot.slane %v697, %v700
        %v702 = vmul.f32 %v567, %v701
        %v703 = vmul.f32 %v568, %v701
        %v704 = vmul.f32 %v569, %v701
        %v708 = vrot.slane %v702, 2
        %v709 = vrot.slane %v703, 2
        %v710 = vsel %vm451, %v708, %v709
        %v711 = vrot.slane %v704, 2
        %v712 = vsel %vm451, %v709, %v711
        %v715 = vadd.f32 %v695, %v710
        %v716 = vadd.f32 %v696, %v712
        %v717 = vld [vmem:[%s3 + $0x7] sm:$0x1]
        %v718 = vlaneseq
        %v719 = vshrl.u32 %v718, 7
        %v720 = vsub.s32 0, %v719
        %v721 = vrot.slane %v717, %v720
        %723 = vrot.lane.b32.xlu0 %v721, 1
        %v724 = vpop.permute.xlu0 %723
        %v726 = vmul.f32 %v567, %v724
        %v727 = vmul.f32 %v568, %v724
        %v728 = vmul.f32 %v569, %v724
        %v732 = vrot.slane %v726, 2
        %v733 = vrot.slane %v727, 2
        %v734 = vsel %vm451, %v732, %v733
        %v735 = vrot.slane %v728, 2
        %v736 = vsel %vm451, %v733, %v735
        %737 = vrot.lane.b32.xlu0 %v734, 127
        %v738 = vpop.permute.xlu0 %737
        %739 = vrot.lane.b32.xlu0 %v736, 127
        %v740 = vpop.permute.xlu0 %739
        %v743 = vadd.f32 %v715, %v738
        %v744 = vadd.f32 %v716, %v740
        %v745 = vld [vmem:[%s3 + $0x8] sm:$0x1]
        %v746 = vlaneseq
        %v747 = vshrl.u32 %v746, 7
        %v748 = vsub.s32 0, %v747
        %v749 = vrot.slane %v745, %v748
        %751 = vrot.lane.b32.xlu0 %v749, 2
        %v752 = vpop.permute.xlu0 %751
        %v754 = vmul.f32 %v567, %v752
        %v755 = vmul.f32 %v568, %v752
        %v756 = vmul.f32 %v569, %v752
        %v760 = vrot.slane %v754, 2
        %v761 = vrot.slane %v755, 2
        %v762 = vsel %vm451, %v760, %v761
        %v763 = vrot.slane %v756, 2
        %v764 = vsel %vm451, %v761, %v763
        %765 = vrot.lane.b32.xlu0 %v762, 126
        %v766 = vpop.permute.xlu0 %765
        %767 = vrot.lane.b32.xlu0 %v764, 126
        %v768 = vpop.permute.xlu0 %767
        %v771 = vadd.f32 %v743, %v766
        %v772 = vadd.f32 %v744, %v768
        %775 = vrot.lane.b32.xlu0 %v771, 108
        %v776 = vpop.permute.xlu0 %775
        %777 = vrot.lane.b32.xlu0 %v772, 108
        %v778 = vpop.permute.xlu0 %777
        %v781 = vadd.f32 %v771, %v776
        %v782 = vadd.f32 %v772, %v778
        %783 = vrot.lane.b32.xlu0 %v771, 88
        %v784 = vpop.permute.xlu0 %783
        %785 = vrot.lane.b32.xlu0 %v772, 88
        %v786 = vpop.permute.xlu0 %785
        %v789 = vadd.f32 %v781, %v784
        %v790 = vadd.f32 %v782, %v786
        %791 = vrot.lane.b32.xlu0 %v771, 68
        %v792 = vpop.permute.xlu0 %791
        %793 = vrot.lane.b32.xlu0 %v772, 68
        %v794 = vpop.permute.xlu0 %793
        %v797 = vadd.f32 %v789, %v792
        %v798 = vadd.f32 %v790, %v794
        %799 = vrot.lane.b32.xlu0 %v771, 48
        %v800 = vpop.permute.xlu0 %799
        %801 = vrot.lane.b32.xlu0 %v772, 48
        %v802 = vpop.permute.xlu0 %801
        %v805 = vadd.f32 %v797, %v800
        %v806 = vadd.f32 %v798, %v802
        %s807 = sld [smem:[#allocation3]]
        %v808 = vstv %s807
        %v809 = vadd.f32 %v805, %v808
        %v810 = vadd.f32 %v806, %v808
        %vm811 = vcmask 130048
        %812 = vst.msk [vmem:[%s218] sm:$0xff] %vm811, %v809
        %813 = vst.msk [vmem:[%s218 + $0x8] sm:$0xff] %vm811, %v810
        %s814 = sand.u32 %s138, 1
        %s815 = scalar_lea.sflag [#allocation5], %s814
        %s816 = sand.u32 %s138, 1
        %s817 = smul.addr %s816, 16
        %s818 = scalar_lea.vmem [#allocation4], %s817
        // Predicated region
        $region41: #{edge_detector_forward.1} parent=39 // pred_check
          %p819 = pneg %p148
        $region42: #{edge_detector_forward.1} parent=39 // pred_check_branch
          %821 = sbr.rel (%p819) target = $region44
        $region43: #{edge_detector_forward.1} parent=39 // pred_region
          %s823 = ssub.s32 256, 256
          %824 = vsyncadd %s815, %s823
          %s825 = smul.addr %s20, 2
          %s826 = smul.addr %s825, 128
          %s827 = scalar_lea.hbm %s5, %s826
          %s828 = sshll.u32 %s818, 4
          %s829 = int_to_ptr.vmem [resolvable:$true] %s828
          %834 = dma.vmem_to_hbm [thread:$0]  %s829, 256, %s827, %s815, 128, 128, 8
        $region44: #{edge_detector_forward.1} parent=39 // pred_fallthru
          _
      $region40: #{edge_detector_forward.1} parent=5 // pred_fallthru
        _
      %p835 = scmp.le.s32.totalorder 2, %s15
      // Predicated region
      $region45: #{edge_detector_forward.1} parent=5 // pred_check
        %p836 = pneg %p835
      $region46: #{edge_detector_forward.1} parent=5 // pred_check_branch
        %838 = sbr.rel (%p836) target = $region48
      $region47: #{edge_detector_forward.1} parent=5 // pred_region
        %s839 = ssub.s32 %s15, 2
        // Predicated region
        $region49: #{edge_detector_forward.1} parent=47 // pred_check
          %p840 = pneg %p154
        $region50: #{edge_detector_forward.1} parent=47 // pred_check_branch
          %842 = sbr.rel (%p840) target = $region52
        $region51: #{edge_detector_forward.1} parent=47 // pred_region
          %s843 = sand.u32 %s139, 1
          %s844 = scalar_lea.sflag [#allocation5], %s843
          %s845 = sand.u32 %s139, 1
          %s846 = smul.addr %s845, 16
          %s847 = scalar_lea.vmem [#allocation4], %s846
          %848 = dma.done %s844, 256
        $region52: #{edge_detector_forward.1} parent=47 // pred_fallthru
          _
      $region48: #{edge_detector_forward.1} parent=5 // pred_fallthru
        _
    $region6: #{edge_detector_forward.1} parent=1 // loop_footer
      %s19 = sadd.s32 1, %s15
    $region7: #{edge_detector_forward.1} parent=1 // loop_footer_branch
      %14 = sbr.rel target = $region3
    $region8: #{edge_detector_forward.1} parent=1 // loop_exit
      _
    %849 = vsyncpa [#allocation5], 1
    %s850 = scalar_lea.sflag [#allocation5], 1
    %851 = vsyncpa %s850, 1

</llo_original>
